<compile_context>
chip_gen: v7x
topology: tpu7x:2x2x1
jax: 0.10.0
libtpu: 0.0.40
codegen_flags: <defaults>
</compile_context>

<pallas_src>
import math

import jax
import jax.numpy as jnp
from jax import lax
from jax.experimental import pallas as pl
from jax.experimental.pallas import tpu as pltpu


def _round_up(x, m):
    return (x + m - 1) // m * m


def sparse_linear_kernel(x_ref, w_ref, b_ref, o_ref, acc_ref):
    # x_ref:   VMEM (Tn, h)     int32 indices for this row block
    # w_ref:   VMEM (Tv, E_pad) vocab slab v of the (padded) embedding table
    # b_ref:   VMEM (1, E_pad)  bias (same block every step)
    # o_ref:   VMEM (Tn, E_pad) output block (same block across the v axis)
    # acc_ref: VMEM (Tn, E_pad) f32 accumulator scratch
    v = pl.program_id(1)

    @pl.when(v == 0)
    def _():
        acc_ref[...] = jnp.zeros_like(acc_ref)

    x = x_ref[...]                                     # (Tn, h) int32
    tn, h = x.shape
    tv = w_ref.shape[0]

    # counts[i, t] = number of j with X[i, j] == v*Tv + t
    vocab_ids = v * tv + lax.broadcasted_iota(jnp.int32, (tn, tv), 1)
    counts = jnp.zeros((tn, tv), jnp.float32)
    for j in range(h):                                 # h is small & static -> unrolled
        counts = counts + (vocab_ids == x[:, j:j + 1]).astype(jnp.float32)

    # Gather-and-sum over this vocab slab == counts @ W_slab  (MXU, f32 acc)
    w = w_ref[...]
    acc_ref[...] += jnp.dot(counts.astype(w.dtype), w,
                            preferred_element_type=jnp.float32)

    @pl.when(v == pl.num_programs(1) - 1)
    def _():
        o_ref[...] = (acc_ref[...] + b_ref[...]).astype(o_ref.dtype)


def sparse_linear(X, W, b, *, block_n=128, block_v=512):
    """out[i] = sum_j W[X[i, j]] + b.   X: [n, h] int, W: [V, E], b: [E] -> [n, E] f32."""
    n, h = X.shape
    V, E = W.shape

    # Lane/sublane-dense padded shapes.
    E_pad = _round_up(E, 128)
    Tn = min(_round_up(block_n, 8), _round_up(n, 8))
    n_pad = _round_up(n, Tn)
    Tv = min(_round_up(block_v, 8), _round_up(V, 8))
    V_pad = _round_up(V, Tv)

    Xp = jnp.zeros((n_pad, h), jnp.int32).at[:n, :].set(X.astype(jnp.int32))
    Wp = jnp.zeros((V_pad, E_pad), W.dtype).at[:V, :E].set(W)
    bp = jnp.zeros((1, E_pad), jnp.float32).at[0, :E].set(b.astype(jnp.float32))

    grid = (n_pad // Tn, V_pad // Tv)   # vocab (reduction) axis last

    out = pl.pallas_call(
        sparse_linear_kernel,
        out_shape=jax.ShapeDtypeStruct((n_pad, E_pad), jnp.float32),
        grid_spec=pltpu.PrefetchScalarGridSpec(
            num_scalar_prefetch=0,
            grid=grid,
            in_specs=[
                pl.BlockSpec((Tn, h), lambda i, v: (i, 0)),        # X row block
                pl.BlockSpec((Tv, E_pad), lambda i, v: (v, 0)),    # W vocab slab
                pl.BlockSpec((1, E_pad), lambda i, v: (0, 0)),     # bias
            ],
            out_specs=pl.BlockSpec((Tn, E_pad), lambda i, v: (i, 0)),
            scratch_shapes=[pltpu.VMEM((Tn, E_pad), jnp.float32)],
        ),
        compiler_params=pltpu.CompilerParams(
            dimension_semantics=("parallel", "arbitrary")),
    )(Xp, Wp, bp)

    return out[:n, :E]


def init_params(key, vocab_size, embed_size, padding_idx=0):
    """Deterministic init matching SparseLinearModule.reset_parameters."""
    stdv = 1.0 / math.sqrt(vocab_size)
    kw, kb = jax.random.split(key)
    W = jax.random.uniform(kw, (vocab_size, embed_size),
                           dtype=jnp.float32, minval=-stdv, maxval=stdv)
    b = jax.random.uniform(kb, (embed_size,),
                           dtype=jnp.float32, minval=-stdv, maxval=stdv)
    if padding_idx is not None:
        W = W.at[padding_idx].set(0.0)
    return W, b


if __name__ == "__main__":
    # small shapes: n=20 examples, h=8 feature slots, vocab=200, embed=72
    # (deliberately non-multiples of 8/128 to exercise the padding paths,
    #  small blocks to exercise a multi-step grid: 3 row blocks x 4 vocab slabs)
    n, h = 20, 8
    vocab_size, embed_size = 200, 72
    padding_idx = 0

    key = jax.random.PRNGKey(0)
    k_params, k_idx = jax.random.split(key)

    W, b = init_params(k_params, vocab_size, embed_size, padding_idx)
    # indices in [0, vocab_size); index 0 is the (zeroed) padding row
    X = jax.random.randint(k_idx, (n, h), 0, vocab_size, dtype=jnp.int32)

    out = sparse_linear(X, W, b, block_n=8, block_v=64)
    out = jax.block_until_ready(out)

    # pure-JAX reference
    ref = jnp.take(W, X, axis=0).sum(axis=1) + b
    assert out.shape == (n, embed_size)
    assert jnp.allclose(out, ref, atol=1e-5, rtol=1e-5), (out, ref)

    print("KERNEL_OK")
</pallas_src>

<mosaic_0001>
module attributes {stable_mosaic.version = 11 : i64} {
  func.func @sparse_linear_kernel(%arg0: i32, %arg1: i32, %arg2: memref<8x8xi32, #tpu.memory_space<vmem>>, %arg3: memref<64x128xf32, #tpu.memory_space<vmem>>, %arg4: memref<1x128xf32, #tpu.memory_space<vmem>>, %arg5: memref<8x128xf32, #tpu.memory_space<vmem>>, %arg6: memref<8x128xf32, #tpu.memory_space<vmem>>) attributes {dimension_semantics = [#tpu.dimension_semantics<parallel>, #tpu.dimension_semantics<arbitrary>], iteration_bounds = array<i64: 3, 4>, scalar_prefetch = 0 : i64, scratch_operands = 1 : i64, tpu.core_type = #tpu.core_type<tc>, window_params = [{transform_indices = @transform_0, window_bounds = array<i64: 8, 8>}, {transform_indices = @transform_1, window_bounds = array<i64: 64, 128>}, {pipeline_mode = #tpu.pipeline_mode<synchronous>, transform_indices = @transform_2, window_bounds = array<i64: 1, 128>}, {transform_indices = @transform_3, window_bounds = array<i64: 8, 128>}]} {
    %c0_i32 = arith.constant 0 : i32
    %0 = arith.cmpi eq, %arg1, %c0_i32 : i32
    %1 = arith.extui %0 : i1 to i32
    %c0_i32_0 = arith.constant 0 : i32
    %2 = arith.cmpi ne, %1, %c0_i32_0 : i32
    scf.if %2 {
      %cst_10 = arith.constant 0.000000e+00 : f32
      %65 = vector.broadcast %cst_10 : f32 to vector<8x128xf32>
      %c0_11 = arith.constant 0 : index
      %c0_12 = arith.constant 0 : index
      %66 = vector.load %arg6[%c0_11, %c0_12] : memref<8x128xf32, #tpu.memory_space<vmem>>, vector<8x128xf32>
      tpu.vector_store %arg6[%c0_11, %c0_12], %65 {strides = array<i32>} : memref<8x128xf32, #tpu.memory_space<vmem>>, vector<8x128xf32>,
    } else {
    }
    %c0 = arith.constant 0 : index
    %c0_1 = arith.constant 0 : index
    %3 = vector.load %arg2[%c0, %c0_1] : memref<8x8xi32, #tpu.memory_space<vmem>>, vector<8x8xi32>
    %c64_i32 = arith.constant 64 : i32
    %4 = arith.muli %arg1, %c64_i32 : i32
    %5 = tpu.iota {dimensions = array<i32: 1>} : vector<8x64xi32>
    %6 = vector.broadcast %4 : i32 to vector<8x64xi32>
    %7 = arith.addi %6, %5 : vector<8x64xi32>
    %cst = arith.constant 0.000000e+00 : f32
    %8 = vector.broadcast %cst : f32 to vector<8x64xf32>
    %9 = vector.extract_strided_slice %3 {offsets = [0, 0], sizes = [8, 1], strides = [1, 1]} : vector<8x8xi32> to vector<8x1xi32>
    %10 = vector.broadcast %9 : vector<8x1xi32> to vector<8x64xi32>
    %11 = arith.cmpi eq, %7, %10 : vector<8x64xi32>
    %12 = arith.extui %11 : vector<8x64xi1> to vector<8x64xi32>
    %13 = arith.sitofp %12 : vector<8x64xi32> to vector<8x64xf32>
    %14 = arith.addf %8, %13 : vector<8x64xf32>
    %15 = vector.extract_strided_slice %3 {offsets = [0, 1], sizes = [8, 1], strides = [1, 1]} : vector<8x8xi32> to vector<8x1xi32>
    %16 = vector.broadcast %15 : vector<8x1xi32> to vector<8x64xi32>
    %17 = arith.cmpi eq, %7, %16 : vector<8x64xi32>
    %18 = arith.extui %17 : vector<8x64xi1> to vector<8x64xi32>
    %19 = arith.sitofp %18 : vector<8x64xi32> to vector<8x64xf32>
    %20 = arith.addf %14, %19 : vector<8x64xf32>
    %21 = vector.extract_strided_slice %3 {offsets = [0, 2], sizes = [8, 1], strides = [1, 1]} : vector<8x8xi32> to vector<8x1xi32>
    %22 = vector.broadcast %21 : vector<8x1xi32> to vector<8x64xi32>
    %23 = arith.cmpi eq, %7, %22 : vector<8x64xi32>
    %24 = arith.extui %23 : vector<8x64xi1> to vector<8x64xi32>
    %25 = arith.sitofp %24 : vector<8x64xi32> to vector<8x64xf32>
    %26 = arith.addf %20, %25 : vector<8x64xf32>
    %27 = vector.extract_strided_slice %3 {offsets = [0, 3], sizes = [8, 1], strides = [1, 1]} : vector<8x8xi32> to vector<8x1xi32>
    %28 = vector.broadcast %27 : vector<8x1xi32> to vector<8x64xi32>
    %29 = arith.cmpi eq, %7, %28 : vector<8x64xi32>
    %30 = arith.extui %29 : vector<8x64xi1> to vector<8x64xi32>
    %31 = arith.sitofp %30 : vector<8x64xi32> to vector<8x64xf32>
    %32 = arith.addf %26, %31 : vector<8x64xf32>
    %33 = vector.extract_strided_slice %3 {offsets = [0, 4], sizes = [8, 1], strides = [1, 1]} : vector<8x8xi32> to vector<8x1xi32>
    %34 = vector.broadcast %33 : vector<8x1xi32> to vector<8x64xi32>
    %35 = arith.cmpi eq, %7, %34 : vector<8x64xi32>
    %36 = arith.extui %35 : vector<8x64xi1> to vector<8x64xi32>
    %37 = arith.sitofp %36 : vector<8x64xi32> to vector<8x64xf32>
    %38 = arith.addf %32, %37 : vector<8x64xf32>
    %39 = vector.extract_strided_slice %3 {offsets = [0, 5], sizes = [8, 1], strides = [1, 1]} : vector<8x8xi32> to vector<8x1xi32>
    %40 = vector.broadcast %39 : vector<8x1xi32> to vector<8x64xi32>
    %41 = arith.cmpi eq, %7, %40 : vector<8x64xi32>
    %42 = arith.extui %41 : vector<8x64xi1> to vector<8x64xi32>
    %43 = arith.sitofp %42 : vector<8x64xi32> to vector<8x64xf32>
    %44 = arith.addf %38, %43 : vector<8x64xf32>
    %45 = vector.extract_strided_slice %3 {offsets = [0, 6], sizes = [8, 1], strides = [1, 1]} : vector<8x8xi32> to vector<8x1xi32>
    %46 = vector.broadcast %45 : vector<8x1xi32> to vector<8x64xi32>
    %47 = arith.cmpi eq, %7, %46 : vector<8x64xi32>
    %48 = arith.extui %47 : vector<8x64xi1> to vector<8x64xi32>
    %49 = arith.sitofp %48 : vector<8x64xi32> to vector<8x64xf32>
    %50 = arith.addf %44, %49 : vector<8x64xf32>
    %51 = vector.extract_strided_slice %3 {offsets = [0, 7], sizes = [8, 1], strides = [1, 1]} : vector<8x8xi32> to vector<8x1xi32>
    %52 = vector.broadcast %51 : vector<8x1xi32> to vector<8x64xi32>
    %53 = arith.cmpi eq, %7, %52 : vector<8x64xi32>
    %54 = arith.extui %53 : vector<8x64xi1> to vector<8x64xi32>
    %55 = arith.sitofp %54 : vector<8x64xi32> to vector<8x64xf32>
    %56 = arith.addf %50, %55 : vector<8x64xf32>
    %c0_2 = arith.constant 0 : index
    %c0_3 = arith.constant 0 : index
    %57 = vector.load %arg3[%c0_2, %c0_3] : memref<64x128xf32, #tpu.memory_space<vmem>>, vector<64x128xf32>
    %c0_4 = arith.constant 0 : index
    %c0_5 = arith.constant 0 : index
    %58 = vector.load %arg6[%c0_4, %c0_5] : memref<8x128xf32, #tpu.memory_space<vmem>>, vector<8x128xf32>
    %cst_6 = arith.constant dense<0.000000e+00> : vector<8x128xf32>
    %59 = tpu.matmul %56, %57, %cst_6 {dimension_numbers = #tpu.dot_dimension_numbers<[1], [0], [0], [1], [0, 0, 1, 1], [], []>} : vector<8x64xf32>, vector<64x128xf32>, vector<8x128xf32> -> vector<8x128xf32>
    %60 = arith.addf %58, %59 : vector<8x128xf32>
    %c0_7 = arith.constant 0 : index
    %c0_8 = arith.constant 0 : index
    %61 = vector.load %arg6[%c0_7, %c0_8] : memref<8x128xf32, #tpu.memory_space<vmem>>, vector<8x128xf32>
    tpu.vector_store %arg6[%c0_7, %c0_8], %60 {strides = array<i32>} : memref<8x128xf32, #tpu.memory_space<vmem>>, vector<8x128xf32>,
    %c3_i32 = arith.constant 3 : i32
    %62 = arith.cmpi eq, %arg1, %c3_i32 : i32
    %63 = arith.extui %62 : i1 to i32
    %c0_i32_9 = arith.constant 0 : i32
    %64 = arith.cmpi ne, %63, %c0_i32_9 : i32
    scf.if %64 {
      %c0_10 = arith.constant 0 : index
      %c0_11 = arith.constant 0 : index
      %65 = vector.load %arg6[%c0_10, %c0_11] : memref<8x128xf32, #tpu.memory_space<vmem>>, vector<8x128xf32>
      %c0_12 = arith.constant 0 : index
      %c0_13 = arith.constant 0 : index
      %66 = vector.load %arg4[%c0_12, %c0_13] : memref<1x128xf32, #tpu.memory_space<vmem>>, vector<1x128xf32>
      %67 = vector.broadcast %66 : vector<1x128xf32> to vector<8x128xf32>
      %68 = arith.addf %65, %67 : vector<8x128xf32>
      %c0_14 = arith.constant 0 : index
      %c0_15 = arith.constant 0 : index
      %69 = vector.load %arg5[%c0_14, %c0_15] : memref<8x128xf32, #tpu.memory_space<vmem>>, vector<8x128xf32>
      tpu.vector_store %arg5[%c0_14, %c0_15], %68 {strides = array<i32>} : memref<8x128xf32, #tpu.memory_space<vmem>>, vector<8x128xf32>,
    } else {
    }
    return
  }
  func.func @transform_0(%arg0: i32, %arg1: i32) -> (i32, i32) {
    %c0_i32 = arith.constant 0 : i32
    %c0_i32_0 = arith.constant 0 : i32
    return %arg0, %c0_i32 : i32, i32
  }
  func.func @transform_1(%arg0: i32, %arg1: i32) -> (i32, i32) {
    %c0_i32 = arith.constant 0 : i32
    %c0_i32_0 = arith.constant 0 : i32
    return %arg1, %c0_i32 : i32, i32
  }
  func.func @transform_2(%arg0: i32, %arg1: i32) -> (i32, i32) {
    %c0_i32 = arith.constant 0 : i32
    %c0_i32_0 = arith.constant 0 : i32
    %c0_i32_1 = arith.constant 0 : i32
    return %c0_i32, %c0_i32_0 : i32, i32
  }
  func.func @transform_3(%arg0: i32, %arg1: i32) -> (i32, i32) {
    %c0_i32 = arith.constant 0 : i32
    %c0_i32_0 = arith.constant 0 : i32
    return %arg0, %c0_i32 : i32, i32
  }
}

</mosaic_0001>

<llo_original>
// kernel: tpu_custom_call.1
$region0: #{tpu_custom_call.1}
  #allocation0 [shape = 'u32[]', space=smem, size = 0x4, offset = 0x4, fixed_abs, tag = 'smem constant byte address 0x4 - core index']
  #allocation1 [shape = 'u32[144,128]{1,0:T(1,128)}', space=vmem, size = 0x12000, scoped, tag = 'internal scratch']
  #allocation2 [shape = 'f32[8,128]{1,0:T(8,128)}', space=vmem, size = 0x1000, scoped, tag = 'scratch operand']
  %s0 = inlined_call_operand.vmem [shape: s32[24,8], index: 0, kind: input, shape index: {}]
  %s1 = inlined_call_operand.hbm [shape: f32[256,128], index: 1, kind: input, shape index: {}]
  %s2 = inlined_call_operand.vmem [shape: f32[1,128], index: 2, kind: input, shape index: {}]
  %s3 = inlined_call_operand.hbm [shape: f32[24,128], index: 3, kind: output, shape index: {}]
  %s4 = sld [smem:[#allocation0]]
  $region57: #{tpu_custom_call.1} parent=0
    _
  %s6 = ssub.s32 1, %s4
  %s7 = scalar_select 0, %s6, %s4
  $region1: #{tpu_custom_call.1} parent=0
    #allocation3 [shape = 'u8[65536]{0}', space=vmem, size = 0x10000, scoped, tag = 'input window, operand 1']
    #allocation4 [shape = 's32[2]{0}', space=sflag, size = 0x8, scoped, tag = 'scoped memory for tpu_custom_call.1']
    #allocation5 [shape = 's32[2]{0}', space=sflag, size = 0x8, scoped, tag = 'scoped memory for tpu_custom_call.1']
    #allocation6 [shape = 'u8[8192]{0}', space=vmem, size = 0x2000, scoped, tag = 'output window, operand 0']
    %8 = vsyncpa [#allocation4], 0
    %s9 = scalar_lea.sflag [#allocation4], 1
    %10 = vsyncpa %s9, 0
    %11 = vsyncpa [#allocation5], 0
    %s12 = scalar_lea.sflag [#allocation5], 1
    %13 = vsyncpa %s12, 0
    loop: start=0, step=1, limit=14
    $region2: #{tpu_custom_call.1} parent=1 // loop_pre_header
      _
    $region3: #{tpu_custom_call.1} parent=1 // loop_header
      %s15 = sphi 0, %s19
      %p16 = scmp.ge.s32.totalorder %s15, 14
      %s22 = sphi 0, %s34
      %s23 = sphi 0, %s30
      %s24 = sphi 0, %s22
      %s25 = sphi 0, %s23
      %s26 = sphi 0, %s24
      %s27 = sphi 0, %s25
      %s37 = sphi 0, %s39
      %s40 = sphi 0, %s37
      %s41 = sphi 0, %s40
      %s57 = sphi 0, %s41
      %s63 = sphi 0, %s65
      %s66 = sphi 0, %s63
      %s67 = sphi 0, %s66
      %s83 = sphi 0, %s67
      %s87 = sphi 0, %s87
      %s89 = sphi 0, %s87
      %s90 = sphi 0, %s89
      %s104 = sphi 0, %s90
      %s110 = sphi 0, %s112
      %s113 = sphi 0, %s110
      %s114 = sphi 0, %s113
      %s130 = sphi 0, %s114
    $region4: #{tpu_custom_call.1} parent=1 // loop_header_branch
      %18 = sbr.rel (%p16) target = $region8
    $region5: #{tpu_custom_call.1} parent=1 // loop_body
      %s20 = ssub.s32 %s15, 1
      %s21 = ssub.s32 %s15, 2
      %s28 = sadd.s32 1, %s23
      %p29 = scmp.ge.s32.totalorder %s28, 4
      %s30 = scalar_select %p29, 0, %s28
      %s31 = sadd.s32 1, %s22
      %s32 = scalar_select %p29, %s31, %s22
      %p33 = scmp.ge.s32.totalorder %s32, 3
      %s34 = scalar_select %p33, 0, %s32
      %s35 = ssub.s32 %s22, %s34
      %p36 = scmp.eq.s32.totalorder %s35, 0
      %s38 = sadd.s32 %s37, 1
      %s39 = scalar_select %p36, %s37, %s38
      %p42 = pneg %p36
      %p43 = scmp.eq.s32.totalorder %s15, 11
      %p44 = por %p42, %p43
      %p45 = scmp.ne.s32.totalorder %s37, %s40
      %p46 = scmp.eq.s32.totalorder %s15, 0
      %p47 = por %p45, %p46
      %p48 = scmp.ne.s32.totalorder %s37, %s40
      %p49 = scmp.eq.s32.totalorder %s20, 11
      %p50 = por %p48, %p49
      %p51 = scmp.ne.s32.totalorder %s40, %s41
      %p52 = scmp.eq.s32.totalorder %s20, 0
      %p53 = por %p51, %p52
      %p54 = scmp.ne.s32.totalorder %s40, %s41
      %p55 = scmp.eq.s32.totalorder %s21, 11
      %p56 = por %p54, %p55
      %p58 = scmp.ne.s32.totalorder %s41, %s57
      %p59 = scmp.eq.s32.totalorder %s21, 0
      %p60 = por %p58, %p59
      %s61 = ssub.s32 %s23, %s30
      %p62 = scmp.eq.s32.totalorder %s61, 0
      %s64 = sadd.s32 %s63, 1
      %s65 = scalar_select %p62, %s63, %s64
      %p68 = pneg %p62
      %p69 = scmp.eq.s32.totalorder %s15, 11
      %p70 = por %p68, %p69
      %p71 = scmp.ne.s32.totalorder %s63, %s66
      %p72 = scmp.eq.s32.totalorder %s15, 0
      %p73 = por %p71, %p72
      %p74 = scmp.ne.s32.totalorder %s63, %s66
      %p75 = scmp.eq.s32.totalorder %s20, 11
      %p76 = por %p74, %p75
      %p77 = scmp.ne.s32.totalorder %s66, %s67
      %p78 = scmp.eq.s32.totalorder %s20, 0
      %p79 = por %p77, %p78
      %p80 = scmp.ne.s32.totalorder %s66, %s67
      %p81 = scmp.eq.s32.totalorder %s21, 11
      %p82 = por %p80, %p81
      %p84 = scmp.ne.s32.totalorder %s67, %s83
      %p85 = scmp.eq.s32.totalorder %s21, 0
      %p86 = por %p84, %p85
      %s88 = sadd.s32 %s87, 1
      %p91 = scmp.eq.s32.totalorder %s15, 11
      %p92 = scmp.ne.s32.totalorder %s87, %s89
      %p93 = scmp.eq.s32.totalorder %s15, 0
      %p94 = por %p92, %p93
      %p95 = scmp.ne.s32.totalorder %s87, %s89
      %p96 = scmp.eq.s32.totalorder %s20, 11
      %p97 = por %p95, %p96
      %p98 = scmp.ne.s32.totalorder %s89, %s90
      %p99 = scmp.eq.s32.totalorder %s20, 0
      %p100 = por %p98, %p99
      %p101 = scmp.ne.s32.totalorder %s89, %s90
      %p102 = scmp.eq.s32.totalorder %s21, 11
      %p103 = por %p101, %p102
      %p105 = scmp.ne.s32.totalorder %s90, %s104
      %p106 = scmp.eq.s32.totalorder %s21, 0
      %p107 = por %p105, %p106
      %s108 = ssub.s32 %s22, %s34
      %p109 = scmp.eq.s32.totalorder %s108, 0
      %s111 = sadd.s32 %s110, 1
      %s112 = scalar_select %p109, %s110, %s111
      %p115 = pneg %p109
      %p116 = scmp.eq.s32.totalorder %s15, 11
      %p117 = por %p115, %p116
      %p118 = scmp.ne.s32.totalorder %s110, %s113
      %p119 = scmp.eq.s32.totalorder %s15, 0
      %p120 = por %p118, %p119
      %p121 = scmp.ne.s32.totalorder %s110, %s113
      %p122 = scmp.eq.s32.totalorder %s20, 11
      %p123 = por %p121, %p122
      %p124 = scmp.ne.s32.totalorder %s113, %s114
      %p125 = scmp.eq.s32.totalorder %s20, 0
      %p126 = por %p124, %p125
      %p127 = scmp.ne.s32.totalorder %s113, %s114
      %p128 = scmp.eq.s32.totalorder %s21, 11
      %p129 = por %p127, %p128
      %p131 = scmp.ne.s32.totalorder %s114, %s130
      %p132 = scmp.eq.s32.totalorder %s21, 0
      %p133 = por %p131, %p132
      %p134 = scmp.le.s32.totalorder 1, %s15
      %p135 = scmp.lt.s32.totalorder %s15, 13
      %p136 = pnand %p134, %p135
      %p137 = pneg %p136
      // Predicated region
      $region9: #{tpu_custom_call.1} parent=5 // pred_check
        _
      $region10: #{tpu_custom_call.1} parent=5 // pred_check_branch
        %139 = sbr.rel (%p136) target = $region12
      $region11: #{tpu_custom_call.1} parent=5 // pred_region
        %s140 = ssub.s32 %s15, 1
        // Predicated region
        $region13: #{tpu_custom_call.1} parent=11 // pred_check
          %p141 = pneg %p100
        $region14: #{tpu_custom_call.1} parent=11 // pred_check_branch
          %143 = sbr.rel (%p141) target = $region16
        $region15: #{tpu_custom_call.1} parent=11 // pred_region
          _
        $region16: #{tpu_custom_call.1} parent=11 // pred_fallthru
          _
      $region12: #{tpu_custom_call.1} parent=5 // pred_fallthru
        _
      %p144 = scmp.lt.s32.totalorder %s15, 12
      // Predicated region
      $region17: #{tpu_custom_call.1} parent=5 // pred_check
        %p145 = pneg %p144
      $region18: #{tpu_custom_call.1} parent=5 // pred_check_branch
        %147 = sbr.rel (%p145) target = $region20
      $region19: #{tpu_custom_call.1} parent=5 // pred_region
        // Predicated region
        $region21: #{tpu_custom_call.1} parent=19 // pred_check
          %p148 = pneg %p47
        $region22: #{tpu_custom_call.1} parent=19 // pred_check_branch
          %150 = sbr.rel (%p148) target = $region24
        $region23: #{tpu_custom_call.1} parent=19 // pred_region
          %p151 = scmp.lt.s32.totalorder %s22, 2
          %s152 = scalar_select %p151, %s22, 2
          %s153 = smul.addr %s152, 8
          %s154 = scalar_lea.vmem %s0, %s153
        $region24: #{tpu_custom_call.1} parent=19 // pred_fallthru
          _
        // Predicated region
        $region25: #{tpu_custom_call.1} parent=19 // pred_check
          %p155 = pneg %p73
        $region26: #{tpu_custom_call.1} parent=19 // pred_check_branch
          %157 = sbr.rel (%p155) target = $region28
        $region27: #{tpu_custom_call.1} parent=19 // pred_region
          %s158 = sand.u32 %s63, 1
          %s159 = scalar_lea.sflag [#allocation4], %s158
          %s160 = sand.u32 %s63, 1
          %s161 = smul.addr %s160, 64
          %s162 = scalar_lea.vmem [#allocation3], %s161
          %s163 = smul.u32 8, %s23
          %s165 = ssub.s32 1024, 1024
          %166 = vsyncadd %s159, %s165
          %s167 = smul.addr %s163, 128
          %s168 = scalar_lea.hbm %s1, %s167
          %s169 = sshll.u32 %s162, 4
          %s170 = int_to_ptr.vmem [resolvable:$true] %s169
          %175 = dma.hbm_to_vmem [thread:$0]  %s168, 1024, %s170, %s159, 128, 128, 8
        $region28: #{tpu_custom_call.1} parent=19 // pred_fallthru
          _
      $region20: #{tpu_custom_call.1} parent=5 // pred_fallthru
        _
      %p176 = scmp.le.s32.totalorder 1, %s15
      %p177 = scmp.lt.s32.totalorder %s15, 13
      %p178 = pnand %p176, %p177
      %p179 = pneg %p178
      // Predicated region
      $region29: #{tpu_custom_call.1} parent=5 // pred_check
        _
      $region30: #{tpu_custom_call.1} parent=5 // pred_check_branch
        %181 = sbr.rel (%p178) target = $region32
      $region31: #{tpu_custom_call.1} parent=5 // pred_region
        %s182 = ssub.s32 %s15, 1
        %s183 = sand.u32 %s66, 1
        %s184 = scalar_lea.sflag [#allocation4], %s183
        %s185 = sand.u32 %s66, 1
        %s186 = smul.addr %s185, 64
        %s187 = scalar_lea.vmem [#allocation3], %s186
        // Predicated region
        $region33: #{tpu_custom_call.1} parent=31 // pred_check
          %p188 = pneg %p79
        $region34: #{tpu_custom_call.1} parent=31 // pred_check_branch
          %190 = sbr.rel (%p188) target = $region36
        $region35: #{tpu_custom_call.1} parent=31 // pred_region
          %191 = dma.done %s184, 1024
        $region36: #{tpu_custom_call.1} parent=31 // pred_fallthru
          _
        %p192 = scmp.lt.s32.totalorder %s24, 2
        %s193 = scalar_select %p192, %s24, 2
        %s194 = smul.addr %s193, 8
        %s195 = scalar_lea.vmem %s0, %s194
        %p196 = pneg %p53
        %p197 = pneg %p50
        %s198 = sand.u32 %s66, 1
        %s199 = scalar_lea.sflag [#allocation4], %s198
        %s200 = sand.u32 %s66, 1
        %s201 = smul.addr %s200, 64
        %s202 = scalar_lea.vmem [#allocation3], %s201
        %p203 = pneg %p79
        %p204 = pneg %p76
        %p205 = pneg %p100
        %p206 = pneg %p97
        %p207 = pneg %p126
        %p208 = pneg %p123
        %s209 = sand.u32 %s113, 1
        %s210 = scalar_lea.sflag [#allocation5], %s209
        %s211 = sand.u32 %s113, 1
        %s212 = smul.addr %s211, 8
        %s213 = scalar_lea.vmem [#allocation6], %s212
        %p214 = scmp.lt.s32.totalorder %s24, 2
        %s215 = scalar_select %p214, %s24, 2
        %s216 = smul.addr %s215, 8
        %s217 = scalar_lea.vmem %s0, %s216
        %s218 = smul.u32 8, %s25
        %p219 = scmp.eq.s32.totalorder %s25, 0
        // Predicated region
        $region37: #{tpu_custom_call.1} parent=31 // pred_check
          %p220 = pneg %p219
        $region38: #{tpu_custom_call.1} parent=31 // pred_check_branch
          %222 = sbr.rel (%p220) target = $region40
        $region39: #{tpu_custom_call.1} parent=31 // pred_region
          %223 = vst [vmem:[#allocation2] sm:$0xff] 0.0
        $region40: #{tpu_custom_call.1} parent=31 // pred_fallthru
          _
        %v224 = vld [vmem:[%s217] sm:$0xff]
        %s225 = smul.u32 %s25, 64
        %v226 = vlaneseq
        %v227 = vand.u32 %v226, 127
        %v228 = vstv %s225
        %v229 = vadd.s32 %v228, %v227
        %230 = vset.pattern.permute.xlu0 0
        %231 = vperm.xlu0 %230, %v224
        %v232 = vpop.permute.xlu0 %231
        %vm233 = vcmp.eq.s32.totalorder %v229, %v232
        %v234 = vsel %vm233, 1, 0
        %v235 = vcvt.s32.f32 %v234
        %v236 = vadd.f32 %v235, 0.0
        %237 = vset.pattern.permute.xlu0 1
        %238 = vperm.xlu0 %237, %v224
        %v239 = vpop.permute.xlu0 %238
        %vm240 = vcmp.eq.s32.totalorder %v229, %v239
        %v241 = vsel %vm240, 1, 0
        %v242 = vcvt.s32.f32 %v241
        %v243 = vadd.f32 %v236, %v242
        %244 = vset.pattern.permute.xlu0 2
        %245 = vperm.xlu0 %244, %v224
        %v246 = vpop.permute.xlu0 %245
        %vm247 = vcmp.eq.s32.totalorder %v229, %v246
        %v248 = vsel %vm247, 1, 0
        %v249 = vcvt.s32.f32 %v248
        %v250 = vadd.f32 %v243, %v249
        %251 = vset.pattern.permute.xlu0 3
        %252 = vperm.xlu0 %251, %v224
        %v253 = vpop.permute.xlu0 %252
        %vm254 = vcmp.eq.s32.totalorder %v229, %v253
        %v255 = vsel %vm254, 1, 0
        %v256 = vcvt.s32.f32 %v255
        %v257 = vadd.f32 %v250, %v256
        %258 = vset.pattern.permute.xlu0 4
        %259 = vperm.xlu0 %258, %v224
        %v260 = vpop.permute.xlu0 %259
        %vm261 = vcmp.eq.s32.totalorder %v229, %v260
        %v262 = vsel %vm261, 1, 0
        %v263 = vcvt.s32.f32 %v262
        %v264 = vadd.f32 %v257, %v263
        %265 = vset.pattern.permute.xlu0 5
        %266 = vperm.xlu0 %265, %v224
        %v267 = vpop.permute.xlu0 %266
        %vm268 = vcmp.eq.s32.totalorder %v229, %v267
        %v269 = vsel %vm268, 1, 0
        %v270 = vcvt.s32.f32 %v269
        %v271 = vadd.f32 %v264, %v270
        %272 = vset.pattern.permute.xlu0 6
        %273 = vperm.xlu0 %272, %v224
        %v274 = vpop.permute.xlu0 %273
        %vm275 = vcmp.eq.s32.totalorder %v229, %v274
        %v276 = vsel %vm275, 1, 0
        %v277 = vcvt.s32.f32 %v276
        %v278 = vadd.f32 %v271, %v277
        %279 = vset.pattern.permute.xlu0 7
        %280 = vperm.xlu0 %279, %v224
        %v281 = vpop.permute.xlu0 %280
        %vm282 = vcmp.eq.s32.totalorder %v229, %v281
        %v283 = vsel %vm282, 1, 0
        %v284 = vcvt.s32.f32 %v283
        %v285 = vadd.f32 %v278, %v284
        %v286 = vld [vmem:[%s187] sm:$0xff]
        %v287 = vld [vmem:[%s187 + $0x8] sm:$0xff]
        %v288 = vld [vmem:[%s187 + $0x10] sm:$0xff]
        %v289 = vld [vmem:[%s187 + $0x18] sm:$0xff]
        %v290 = vld [vmem:[%s187 + $0x20] sm:$0xff]
        %v291 = vld [vmem:[%s187 + $0x28] sm:$0xff]
        %v292 = vld [vmem:[%s187 + $0x30] sm:$0xff]
        %v293 = vld [vmem:[%s187 + $0x38] sm:$0xff]
        %v294 = vld [vmem:[#allocation2] sm:$0xff]
        %vm295 = vcmask 523264
        %v297 = vsel %vm295, %v285, 0
        %299 = vmatprep.subr.mxu0 0.0
        %300 = vmatpush1.msra.mxu0 %v286
        %301 = vmatprep.subr.mxu0 0.0
        %302 = vmatpush1.msra.mxu0 %v287
        %303 = vmatprep.subr.mxu0 0.0
        %304 = vmatpush1.msra.mxu0 %v288
        %305 = vmatprep.subr.mxu0 0.0
        %306 = vmatpush1.msra.mxu0 %v289
        %307 = vmatprep.subr.mxu0 0.0
        %308 = vmatpush1.msra.mxu0 %v290
        %309 = vmatprep.subr.mxu0 0.0
        %310 = vmatpush1.msra.mxu0 %v291
        %311 = vmatprep.subr.mxu0 0.0
        %312 = vmatpush1.msra.mxu0 %v292
        %313 = vmatprep.subr.mxu0 0.0
        %314 = vmatpush1.msra.mxu0 %v293
        %315 = vmatprep.subr.mxu0 0.0
        %316 = vmatpush1.msra.mxu0 0.0
        %317 = vmatprep.subr.mxu0 0.0
        %318 = vmatpush1.msra.mxu0 0.0
        %319 = vmatprep.subr.mxu0 0.0
        %320 = vmatpush1.msra.mxu0 0.0
        %321 = vmatprep.subr.mxu0 0.0
        %322 = vmatpush1.msra.mxu0 0.0
        %323 = vmatprep.subr.mxu0 0.0
        %324 = vmatpush1.msra.mxu0 0.0
        %325 = vmatprep.subr.mxu0 0.0
        %326 = vmatpush1.msra.mxu0 0.0
        %327 = vmatprep.subr.mxu0 0.0
        %328 = vmatpush1.msra.mxu0 0.0
        %329 = vmatprep.subr.mxu0 0.0
        %330 = vmatpush1.msra.mxu0 0.0
        %331 = vmatprep.subr.mxu0 0.0
        %332 = vmatpush1.msra.mxu0 0.0
        %333 = vmatprep.subr.mxu0 0.0
        %334 = vmatpush1.msra.mxu0 0.0
        %335 = vmatprep.subr.mxu0 0.0
        %336 = vmatpush1.msra.mxu0 0.0
        %337 = vmatprep.subr.mxu0 0.0
        %338 = vmatpush1.msra.mxu0 0.0
        %339 = vmatprep.subr.mxu0 0.0
        %340 = vmatpush1.msra.mxu0 0.0
        %341 = vmatprep.subr.mxu0 0.0
        %342 = vmatpush1.msra.mxu0 0.0
        %343 = vmatprep.subr.mxu0 0.0
        %344 = vmatpush1.msra.mxu0 0.0
        %345 = vmatprep.subr.mxu0 0.0
        %346 = vmatpush1.msra.mxu0 0.0
        %347 = vmatprep.subr.mxu0 0.0
        %348 = vmatpush1.msra.mxu0 0.0
        %349 = vmatprep.subr.mxu0 0.0
        %350 = vmatpush1.msra.mxu0 0.0
        %351 = vmatprep.subr.mxu0 0.0
        %352 = vmatpush1.msra.mxu0 0.0
        %353 = vmatprep.subr.mxu0 0.0
        %354 = vmatpush1.msra.mxu0 0.0
        %355 = vmatprep.subr.mxu0 0.0
        %356 = vmatpush1.msra.mxu0 0.0
        %357 = vmatprep.subr.mxu0 0.0
        %358 = vmatpush1.msra.mxu0 0.0
        %359 = vmatprep.subr.mxu0 0.0
        %360 = vmatpush1.msra.mxu0 0.0
        %361 = vmatprep.subr.mxu0 0.0
        %362 = vmatpush1.msra.mxu0 0.0
        %363 = vmatprep.mubr.f32.mxu0 0.0
        %364 = vmatmul.mubr.f32.gmra.mrb[0].mxu0 %v297
        %v365 = vpop.f32.mrb[0].mxu0
        %v366 = vadd.f32 0.0, %v365
        %v367 = vpop.f32.mrb[0].mxu0
        %368 = vdwg.mxu0
        %v369 = vadd.f32 %v294, %v366
        %370 = vst [vmem:[#allocation2] sm:$0xff] %v369
        %p371 = scmp.eq.s32.totalorder %s25, 3
        // Predicated region
        $region41: #{tpu_custom_call.1} parent=31 // pred_check
          %p372 = pneg %p371
        $region42: #{tpu_custom_call.1} parent=31 // pred_check_branch
          %374 = sbr.rel (%p372) target = $region44
        $region43: #{tpu_custom_call.1} parent=31 // pred_region
          %v375 = vld [vmem:[#allocation2] sm:$0xff]
          %v376 = vld [vmem:[%s2] sm:$0x1]
          %v378 = vlaneseq
          %v379 = vshrl.u32 %v378, 7
          %v380 = vsub.s32 0, %v379
          %v381 = vrot.slane %v376, %v380
          %v383 = vadd.f32 %v375, %v381
          %384 = vst [vmem:[%s213] sm:$0xff] %v383
        $region44: #{tpu_custom_call.1} parent=31 // pred_fallthru
          _
        %s385 = sand.u32 %s113, 1
        %s386 = scalar_lea.sflag [#allocation5], %s385
        %s387 = sand.u32 %s113, 1
        %s388 = smul.addr %s387, 8
        %s389 = scalar_lea.vmem [#allocation6], %s388
        // Predicated region
        $region45: #{tpu_custom_call.1} parent=31 // pred_check
          %p390 = pneg %p123
        $region46: #{tpu_custom_call.1} parent=31 // pred_check_branch
          %392 = sbr.rel (%p390) target = $region48
        $region47: #{tpu_custom_call.1} parent=31 // pred_region
          %s394 = ssub.s32 128, 128
          %395 = vsyncadd %s386, %s394
          %s396 = smul.addr %s24, 128
          %s397 = scalar_lea.hbm %s3, %s396
          %s399 = sshll.u32 %s389, 4
          %s400 = int_to_ptr.vmem [resolvable:$true] %s399
          %402 = dma.vmem_to_hbm [thread:$0]  %s400, 128, %s397, %s386
        $region48: #{tpu_custom_call.1} parent=31 // pred_fallthru
          _
      $region32: #{tpu_custom_call.1} parent=5 // pred_fallthru
        _
      %p403 = scmp.le.s32.totalorder 2, %s15
      // Predicated region
      $region49: #{tpu_custom_call.1} parent=5 // pred_check
        %p404 = pneg %p403
      $region50: #{tpu_custom_call.1} parent=5 // pred_check_branch
        %406 = sbr.rel (%p404) target = $region52
      $region51: #{tpu_custom_call.1} parent=5 // pred_region
        %s407 = ssub.s32 %s15, 2
        // Predicated region
        $region53: #{tpu_custom_call.1} parent=51 // pred_check
          %p408 = pneg %p129
        $region54: #{tpu_custom_call.1} parent=51 // pred_check_branch
          %410 = sbr.rel (%p408) target = $region56
        $region55: #{tpu_custom_call.1} parent=51 // pred_region
          %s411 = sand.u32 %s114, 1
          %s412 = scalar_lea.sflag [#allocation5], %s411
          %s413 = sand.u32 %s114, 1
          %s414 = smul.addr %s413, 8
          %s415 = scalar_lea.vmem [#allocation6], %s414
          %416 = dma.done %s412, 128
        $region56: #{tpu_custom_call.1} parent=51 // pred_fallthru
          _
      $region52: #{tpu_custom_call.1} parent=5 // pred_fallthru
        _
    $region6: #{tpu_custom_call.1} parent=1 // loop_footer
      %s19 = sadd.s32 1, %s15
    $region7: #{tpu_custom_call.1} parent=1 // loop_footer_branch
      %14 = sbr.rel target = $region3
    $region8: #{tpu_custom_call.1} parent=1 // loop_exit
      _
    %417 = vsyncpa [#allocation4], 1
    %s418 = scalar_lea.sflag [#allocation4], 1
    %419 = vsyncpa %s418, 1
    %420 = vsyncpa [#allocation5], 1
    %s421 = scalar_lea.sflag [#allocation5], 1
    %422 = vsyncpa %s421, 1

</llo_original>
